<compile_context>
chip_gen: v5e
topology: v5e:2x2
jax: 0.10.0
libtpu: 0.0.40
codegen_flags: <defaults>
</compile_context>

<pallas_src>
import functools

import jax
import jax.numpy as jnp
from jax.experimental import pallas as pl
from jax.experimental.pallas import tpu as pltpu

LN_EPS = 1e-5   # PyTorch nn.LayerNorm default
LANES = 128


def _round_up(n, m):
    return ((n + m - 1) // m) * m


def _masked_layernorm(h, gamma, beta, mask, inv_n):
    """LayerNorm over the real (unpadded) lanes only; padded lanes come out as 0."""
    mean = jnp.sum(h, axis=-1, keepdims=True) * inv_n
    centered = jnp.where(mask, h - mean, 0.0)
    var = jnp.sum(centered * centered, axis=-1, keepdims=True) * inv_n
    h_hat = centered * jax.lax.rsqrt(var + LN_EPS)
    return gamma * h_hat + beta          # gamma/beta are zero in padded lanes


def arm_kernel(x_ref, p_ref, o_ref, *, in_pad, h0, h1):
    # Static row offsets into the packed parameter slab.
    w2_off = in_pad
    wm_off = in_pad + LANES
    vec_off = in_pad + 2 * LANES

    x = x_ref[...]                               # (tm, in_pad)  f32
    w1 = p_ref[0:in_pad, :]                      # (in_pad, 128)
    w2 = p_ref[w2_off:w2_off + LANES, :]         # (128, 128)
    wm = p_ref[wm_off:wm_off + LANES, :]         # (128, 128)
    vec = p_ref[vec_off:vec_off + 8, :]          # (8, 128): b1,g1,be1,b2,g2,be2,bm,0
    b1, g1, be1 = vec[0:1], vec[1:2], vec[2:3]
    b2, g2, be2 = vec[3:4], vec[4:5], vec[5:6]
    bm = vec[6:7]

    lane_idx = jax.lax.broadcasted_iota(jnp.int32, (1, LANES), 1)
    mask0 = lane_idx < h0
    mask1 = lane_idx < h1

    # linear1 -> ln1 -> relu
    h = jnp.dot(x, w1, preferred_element_type=jnp.float32) + b1
    h = _masked_layernorm(h, g1, be1, mask0, 1.0 / h0)
    h = jnp.maximum(h, 0.0)

    # linear2 -> ln2 -> relu
    h = jnp.dot(h, w2, preferred_element_type=jnp.float32) + b2
    h = _masked_layernorm(h, g2, be2, mask1, 1.0 / h1)
    h = jnp.maximum(h, 0.0)

    # mu head (lane-dense store; real outputs live in lanes [0, num_outputs))
    mu = jnp.dot(h, wm, preferred_element_type=jnp.float32) + bm
    o_ref[...] = mu.astype(o_ref.dtype)


def _pack_params(p, in_pad):
    """Pack all parameters into one zero-padded (rows, 128) f32 slab (one DMA)."""
    def pad_w(w, rows):
        buf = jnp.zeros((rows, LANES), jnp.float32)
        return buf.at[: w.shape[0], : w.shape[1]].set(w.astype(jnp.float32))

    def pad_v(v):
        buf = jnp.zeros((LANES,), jnp.float32)
        return buf.at[: v.shape[-1]].set(v.reshape(-1).astype(jnp.float32))

    vec_rows = jnp.stack([
        pad_v(p["b1"]), pad_v(p["g1"]), pad_v(p["be1"]),
        pad_v(p["b2"]), pad_v(p["g2"]), pad_v(p["be2"]),
        pad_v(p["bm"]), jnp.zeros((LANES,), jnp.float32),
    ])  # (8, 128)

    return jnp.concatenate([
        pad_w(p["w1"], in_pad),      # rows [0, in_pad)
        pad_w(p["w2"], LANES),       # rows [in_pad, in_pad+128)
        pad_w(p["wm"], LANES),       # rows [in_pad+128, in_pad+256)
        vec_rows,                    # rows [in_pad+256, in_pad+264)
    ], axis=0)


def arm_forward(x, params, *, tm_max=256):
    """ArmModel forward: batch-tiled, fully fused MLP in a single Pallas kernel."""
    batch, num_inputs = x.shape
    h0 = params["w1"].shape[1]
    h1 = params["w2"].shape[1]
    num_outputs = params["wm"].shape[1]

    assert h0 <= LANES and h1 <= LANES and num_outputs <= LANES, \
        "hidden/output widths must fit one 128-lane tile"
    # TODO(synk): tile the hidden/contraction dims if the model is scaled past 128.

    in_pad = _round_up(max(num_inputs, 8), 8)
    tm = min(tm_max, _round_up(batch, 8))
    batch_pad = _round_up(batch, tm)

    # Pad x to (batch_pad, in_pad); padded rows/cols are zero and sliced off at the end.
    x_pad = jnp.zeros((batch_pad, in_pad), jnp.float32).at[:batch, :num_inputs].set(
        x.astype(jnp.float32))

    slab = _pack_params(params, in_pad)
    rows = slab.shape[0]

    kernel = functools.partial(arm_kernel, in_pad=in_pad, h0=h0, h1=h1)

    out = pl.pallas_call(
        kernel,
        out_shape=jax.ShapeDtypeStruct((batch_pad, LANES), jnp.float32),
        grid=(batch_pad // tm,),
        in_specs=[
            pl.BlockSpec((tm, in_pad), lambda i: (i, 0)),     # x tile (pipelined)
            pl.BlockSpec((rows, LANES), lambda i: (0, 0)),    # param slab (resident)
        ],
        out_specs=pl.BlockSpec((tm, LANES), lambda i: (i, 0)),  # lane-dense output
        compiler_params=pltpu.CompilerParams(
            dimension_semantics=("parallel",)),
    )(x_pad, slab)

    return out[:batch, :num_outputs]


def init_params(key, num_inputs, hidden_size, num_outputs):
    """Deterministic init mirroring ArmModel.__init__ (fan-in uniform + small final layer)."""
    ks = jax.random.split(key, 6)
    w_in1 = 1.0 / jnp.sqrt(num_inputs)
    w_h0 = 1.0 / jnp.sqrt(hidden_size[0])
    w_h1 = 1.0 / jnp.sqrt(hidden_size[1])
    wf, bf = 0.003, 0.0003  # WEIGHTS_FINAL_INIT, BIAS_FINAL_INIT

    def u(k, shape, lim):
        return jax.random.uniform(k, shape, jnp.float32, -lim, lim)

    return {
        # linear1: PyTorch weight (h0, in) stored transposed as (in, h0)
        "w1": u(ks[0], (num_inputs, hidden_size[0]), w_in1),
        "b1": u(ks[1], (1, hidden_size[0]), w_h0),
        "g1": jnp.ones((1, hidden_size[0]), jnp.float32),
        "be1": jnp.zeros((1, hidden_size[0]), jnp.float32),
        # linear2
        "w2": u(ks[2], (hidden_size[0], hidden_size[1]), w_h0),
        "b2": u(ks[3], (1, hidden_size[1]), w_h1),
        "g2": jnp.ones((1, hidden_size[1]), jnp.float32),
        "be2": jnp.zeros((1, hidden_size[1]), jnp.float32),
        # mu head
        "wm": u(ks[4], (hidden_size[1], num_outputs), wf),
        "bm": u(ks[5], (1, num_outputs), bf),
    }


def reference_forward(x, p):
    def ln(h, g, b):
        m = jnp.mean(h, axis=-1, keepdims=True)
        v = jnp.mean((h - m) ** 2, axis=-1, keepdims=True)
        return g * ((h - m) / jnp.sqrt(v + LN_EPS)) + b

    h = jax.nn.relu(ln(x @ p["w1"] + p["b1"], p["g1"], p["be1"]))
    h = jax.nn.relu(ln(h @ p["w2"] + p["b2"], p["g2"], p["be2"]))
    return h @ p["wm"] + p["bm"]


if __name__ == "__main__":
    key = jax.random.PRNGKey(0)
    k_x, k_p, k_x2 = jax.random.split(key, 3)

    batch = 8
    num_inputs = 16
    hidden_size = [32, 32]
    num_outputs = 4  # action_space.shape[0]

    params = init_params(k_p, num_inputs, hidden_size, num_outputs)

    # Small case (single grid step).
    x = jax.random.normal(k_x, (batch, num_inputs), jnp.float32)
    mu = arm_forward(x, params)
    jax.block_until_ready(mu)
    ref = reference_forward(x, params)
    assert mu.shape == (batch, num_outputs)
    assert jnp.allclose(mu, ref, atol=1e-5, rtol=1e-5), "mismatch vs reference (small batch)"

    # Larger case exercising the batch grid (>1 tile) and padding path.
    x2 = jax.random.normal(k_x2, (260, num_inputs), jnp.float32)
    mu2 = arm_forward(x2, params)
    jax.block_until_ready(mu2)
    ref2 = reference_forward(x2, params)
    assert mu2.shape == (260, num_outputs)
    assert jnp.allclose(mu2, ref2, atol=1e-5, rtol=1e-5), "mismatch vs reference (tiled batch)"

    print("KERNEL_OK")
</pallas_src>

<mosaic_0001>
module attributes {stable_mosaic.version = 11 : i64} {
  func.func @arm_kernel(%arg0: i32, %arg1: memref<8x16xf32, #tpu.memory_space<vmem>>, %arg2: memref<280x128xf32, #tpu.memory_space<vmem>>, %arg3: memref<8x128xf32, #tpu.memory_space<vmem>>) attributes {dimension_semantics = [#tpu.dimension_semantics<parallel>], iteration_bounds = array<i64: 1>, scalar_prefetch = 0 : i64, scratch_operands = 0 : i64, tpu.core_type = #tpu.core_type<tc>, window_params = [{transform_indices = @transform_0, window_bounds = array<i64: 8, 16>}, {pipeline_mode = #tpu.pipeline_mode<synchronous>, transform_indices = @transform_1, window_bounds = array<i64: 280, 128>}, {transform_indices = @transform_2, window_bounds = array<i64: 8, 128>}]} {
    %c0 = arith.constant 0 : index
    %c0_0 = arith.constant 0 : index
    %0 = vector.load %arg1[%c0, %c0_0] : memref<8x16xf32, #tpu.memory_space<vmem>>, vector<8x16xf32>
    %c0_1 = arith.constant 0 : index
    %c0_2 = arith.constant 0 : index
    %1 = vector.load %arg2[%c0_1, %c0_2] : memref<280x128xf32, #tpu.memory_space<vmem>>, vector<16x128xf32>
    %c16 = arith.constant 16 : index
    %c0_3 = arith.constant 0 : index
    %2 = vector.load %arg2[%c16, %c0_3] : memref<280x128xf32, #tpu.memory_space<vmem>>, vector<128x128xf32>
    %c144 = arith.constant 144 : index
    %c0_4 = arith.constant 0 : index
    %3 = vector.load %arg2[%c144, %c0_4] : memref<280x128xf32, #tpu.memory_space<vmem>>, vector<128x128xf32>
    %c272 = arith.constant 272 : index
    %c0_5 = arith.constant 0 : index
    %4 = vector.load %arg2[%c272, %c0_5] : memref<280x128xf32, #tpu.memory_space<vmem>>, vector<8x128xf32>
    %5 = vector.extract_strided_slice %4 {offsets = [0, 0], sizes = [1, 128], strides = [1, 1]} : vector<8x128xf32> to vector<1x128xf32>
    %6 = vector.extract_strided_slice %4 {offsets = [1, 0], sizes = [1, 128], strides = [1, 1]} : vector<8x128xf32> to vector<1x128xf32>
    %7 = vector.extract_strided_slice %4 {offsets = [2, 0], sizes = [1, 128], strides = [1, 1]} : vector<8x128xf32> to vector<1x128xf32>
    %8 = vector.extract_strided_slice %4 {offsets = [3, 0], sizes = [1, 128], strides = [1, 1]} : vector<8x128xf32> to vector<1x128xf32>
    %9 = vector.extract_strided_slice %4 {offsets = [4, 0], sizes = [1, 128], strides = [1, 1]} : vector<8x128xf32> to vector<1x128xf32>
    %10 = vector.extract_strided_slice %4 {offsets = [5, 0], sizes = [1, 128], strides = [1, 1]} : vector<8x128xf32> to vector<1x128xf32>
    %11 = vector.extract_strided_slice %4 {offsets = [6, 0], sizes = [1, 128], strides = [1, 1]} : vector<8x128xf32> to vector<1x128xf32>
    %12 = tpu.iota {dimensions = array<i32: 1>} : vector<1x128xi32>
    %c32_i32 = arith.constant 32 : i32
    %13 = vector.broadcast %c32_i32 : i32 to vector<1x128xi32>
    %14 = arith.cmpi slt, %12, %13 : vector<1x128xi32>
    %c32_i32_6 = arith.constant 32 : i32
    %15 = vector.broadcast %c32_i32_6 : i32 to vector<1x128xi32>
    %16 = arith.cmpi slt, %12, %15 : vector<1x128xi32>
    %cst = arith.constant dense<0.000000e+00> : vector<8x128xf32>
    %17 = tpu.matmul %0, %1, %cst {dimension_numbers = #tpu.dot_dimension_numbers<[1], [0], [0], [1], [0, 0, 1, 1], [], []>} : vector<8x16xf32>, vector<16x128xf32>, vector<8x128xf32> -> vector<8x128xf32>
    %18 = vector.broadcast %5 : vector<1x128xf32> to vector<8x128xf32>
    %19 = arith.addf %17, %18 : vector<8x128xf32>
    %cst_7 = arith.constant dense<0.000000e+00> : vector<8xf32>
    %20 = vector.multi_reduction <add>, %19, %cst_7 [1] : vector<8x128xf32> to vector<8xf32>
    %21 = vector.shape_cast %20 : vector<8xf32> to vector<8x1xf32>
    %cst_8 = arith.constant 3.125000e-02 : f32
    %22 = vector.broadcast %cst_8 : f32 to vector<8x1xf32>
    %23 = arith.mulf %21, %22 : vector<8x1xf32>
    %24 = vector.broadcast %23 : vector<8x1xf32> to vector<8x128xf32>
    %25 = arith.subf %19, %24 : vector<8x128xf32>
    %cst_9 = arith.constant 0.000000e+00 : f32
    %26 = vector.shape_cast %14 : vector<1x128xi1> to vector<1x128xi1>
    %27 = vector.broadcast %26 : vector<1x128xi1> to vector<8x128xi1>
    %28 = vector.broadcast %cst_9 : f32 to vector<8x128xf32>
    %29 = arith.select %27, %25, %28 : vector<8x128xi1>, vector<8x128xf32>
    %30 = arith.mulf %29, %29 : vector<8x128xf32>
    %cst_10 = arith.constant dense<0.000000e+00> : vector<8xf32>
    %31 = vector.multi_reduction <add>, %30, %cst_10 [1] : vector<8x128xf32> to vector<8xf32>
    %32 = vector.shape_cast %31 : vector<8xf32> to vector<8x1xf32>
    %cst_11 = arith.constant 3.125000e-02 : f32
    %33 = vector.broadcast %cst_11 : f32 to vector<8x1xf32>
    %34 = arith.mulf %32, %33 : vector<8x1xf32>
    %cst_12 = arith.constant 9.99999974E-6 : f32
    %35 = vector.broadcast %cst_12 : f32 to vector<8x1xf32>
    %36 = arith.addf %34, %35 : vector<8x1xf32>
    %37 = math.rsqrt %36 : vector<8x1xf32>
    %38 = vector.broadcast %37 : vector<8x1xf32> to vector<8x128xf32>
    %39 = arith.mulf %29, %38 : vector<8x128xf32>
    %40 = vector.broadcast %6 : vector<1x128xf32> to vector<8x128xf32>
    %41 = arith.mulf %40, %39 : vector<8x128xf32>
    %42 = vector.broadcast %7 : vector<1x128xf32> to vector<8x128xf32>
    %43 = arith.addf %41, %42 : vector<8x128xf32>
    %cst_13 = arith.constant 0.000000e+00 : f32
    %44 = vector.broadcast %cst_13 : f32 to vector<8x128xf32>
    %45 = arith.maximumf %43, %44 : vector<8x128xf32>
    %cst_14 = arith.constant dense<0.000000e+00> : vector<8x128xf32>
    %46 = tpu.matmul %45, %2, %cst_14 {dimension_numbers = #tpu.dot_dimension_numbers<[1], [0], [0], [1], [0, 0, 1, 1], [], []>} : vector<8x128xf32>, vector<128x128xf32>, vector<8x128xf32> -> vector<8x128xf32>
    %47 = vector.broadcast %8 : vector<1x128xf32> to vector<8x128xf32>
    %48 = arith.addf %46, %47 : vector<8x128xf32>
    %cst_15 = arith.constant dense<0.000000e+00> : vector<8xf32>
    %49 = vector.multi_reduction <add>, %48, %cst_15 [1] : vector<8x128xf32> to vector<8xf32>
    %50 = vector.shape_cast %49 : vector<8xf32> to vector<8x1xf32>
    %cst_16 = arith.constant 3.125000e-02 : f32
    %51 = vector.broadcast %cst_16 : f32 to vector<8x1xf32>
    %52 = arith.mulf %50, %51 : vector<8x1xf32>
    %53 = vector.broadcast %52 : vector<8x1xf32> to vector<8x128xf32>
    %54 = arith.subf %48, %53 : vector<8x128xf32>
    %cst_17 = arith.constant 0.000000e+00 : f32
    %55 = vector.shape_cast %16 : vector<1x128xi1> to vector<1x128xi1>
    %56 = vector.broadcast %55 : vector<1x128xi1> to vector<8x128xi1>
    %57 = vector.broadcast %cst_17 : f32 to vector<8x128xf32>
    %58 = arith.select %56, %54, %57 : vector<8x128xi1>, vector<8x128xf32>
    %59 = arith.mulf %58, %58 : vector<8x128xf32>
    %cst_18 = arith.constant dense<0.000000e+00> : vector<8xf32>
    %60 = vector.multi_reduction <add>, %59, %cst_18 [1] : vector<8x128xf32> to vector<8xf32>
    %61 = vector.shape_cast %60 : vector<8xf32> to vector<8x1xf32>
    %cst_19 = arith.constant 3.125000e-02 : f32
    %62 = vector.broadcast %cst_19 : f32 to vector<8x1xf32>
    %63 = arith.mulf %61, %62 : vector<8x1xf32>
    %cst_20 = arith.constant 9.99999974E-6 : f32
    %64 = vector.broadcast %cst_20 : f32 to vector<8x1xf32>
    %65 = arith.addf %63, %64 : vector<8x1xf32>
    %66 = math.rsqrt %65 : vector<8x1xf32>
    %67 = vector.broadcast %66 : vector<8x1xf32> to vector<8x128xf32>
    %68 = arith.mulf %58, %67 : vector<8x128xf32>
    %69 = vector.broadcast %9 : vector<1x128xf32> to vector<8x128xf32>
    %70 = arith.mulf %69, %68 : vector<8x128xf32>
    %71 = vector.broadcast %10 : vector<1x128xf32> to vector<8x128xf32>
    %72 = arith.addf %70, %71 : vector<8x128xf32>
    %cst_21 = arith.constant 0.000000e+00 : f32
    %73 = vector.broadcast %cst_21 : f32 to vector<8x128xf32>
    %74 = arith.maximumf %72, %73 : vector<8x128xf32>
    %cst_22 = arith.constant dense<0.000000e+00> : vector<8x128xf32>
    %75 = tpu.matmul %74, %3, %cst_22 {dimension_numbers = #tpu.dot_dimension_numbers<[1], [0], [0], [1], [0, 0, 1, 1], [], []>} : vector<8x128xf32>, vector<128x128xf32>, vector<8x128xf32> -> vector<8x128xf32>
    %76 = vector.broadcast %11 : vector<1x128xf32> to vector<8x128xf32>
    %77 = arith.addf %75, %76 : vector<8x128xf32>
    %c0_23 = arith.constant 0 : index
    %c0_24 = arith.constant 0 : index
    %78 = vector.load %arg3[%c0_23, %c0_24] : memref<8x128xf32, #tpu.memory_space<vmem>>, vector<8x128xf32>
    tpu.vector_store %arg3[%c0_23, %c0_24], %77 {strides = array<i32>} : memref<8x128xf32, #tpu.memory_space<vmem>>, vector<8x128xf32>,
    return
  }
  func.func @transform_0(%arg0: i32) -> (i32, i32) {
    %c0_i32 = arith.constant 0 : i32
    %c0_i32_0 = arith.constant 0 : i32
    return %arg0, %c0_i32 : i32, i32
  }
  func.func @transform_1(%arg0: i32) -> (i32, i32) {
    %c0_i32 = arith.constant 0 : i32
    %c0_i32_0 = arith.constant 0 : i32
    %c0_i32_1 = arith.constant 0 : i32
    return %c0_i32, %c0_i32_0 : i32, i32
  }
  func.func @transform_2(%arg0: i32) -> (i32, i32) {
    %c0_i32 = arith.constant 0 : i32
    %c0_i32_0 = arith.constant 0 : i32
    return %arg0, %c0_i32 : i32, i32
  }
}

</mosaic_0001>

<llo_original>
// kernel: tpu_custom_call.1
$region0: #{tpu_custom_call.1}
  #allocation0 [shape = 'u32[]', space=smem, size = 0x4, offset = 0x4, fixed_abs, tag = 'smem constant byte address 0x4 - core index']
  #allocation1 [shape = 'u32[72,128]{1,0:T(1,128)}', space=vmem, size = 0x9000, scoped, tag = 'internal scratch']
  %s0 = inlined_call_operand.hbm [shape: f32[8,16], index: 0, kind: input, shape index: {}]
  %s1 = inlined_call_operand.hbm [shape: f32[280,128], index: 1, kind: input, shape index: {}]
  %s2 = inlined_call_operand.hbm [shape: f32[8,128], index: 2, kind: output, shape index: {}]
  %s3 = sld [smem:[#allocation0]]
  $region26: #{tpu_custom_call.1} parent=0
    _
  %s5 = ssub.s32 1, %s3
  %s6 = scalar_select 0, %s5, %s3
  $region1: #{tpu_custom_call.1} parent=0
    #allocation2 [shape = 'u8[4096]{0}', space=vmem, size = 0x1000, scoped, tag = 'input window, operand 0, single buffered']
    #allocation3 [shape = 's32[1]{0}', space=sflag, size = 0x4, scoped, tag = 'scoped memory for tpu_custom_call.1']
    #allocation4 [shape = 's32[1]{0}', space=sflag, size = 0x4, scoped, tag = 'scoped memory for tpu_custom_call.1']
    #allocation5 [shape = 'u8[143360]{0}', space=vmem, size = 0x23000, scoped, tag = 'input window, operand 1, single buffered']
    #allocation6 [shape = 's32[1]{0}', space=sflag, size = 0x4, scoped, tag = 'scoped memory for tpu_custom_call.1']
    #allocation7 [shape = 'u8[4096]{0}', space=vmem, size = 0x1000, scoped, tag = 'output window, operand 0, single buffered']
    %7 = vsyncpa [#allocation3], 0
    %8 = vsyncpa [#allocation6], 0
    %9 = vsyncpa [#allocation4], 0
    // Predicated region
    $region2: #{tpu_custom_call.1} parent=1 // pred_check
      _
    $region3: #{tpu_custom_call.1} parent=1 // pred_check_branch
      %11 = sbr.rel (0) target = $region5
    $region4: #{tpu_custom_call.1} parent=1 // pred_region
      %13 = vsyncadd [#allocation3], 0
      %s15 = sshll.u32 %s0, 4
      %s16 = int_to_ptr.hbm [resolvable:$true] %s15
      %s17 = sshll.u32 [#allocation2], 4
      %s18 = int_to_ptr.vmem [resolvable:$true] %s17
      %20 = dma.hbm_to_vmem [thread:$0]  %s16, 128, %s18, [#allocation3]
    $region5: #{tpu_custom_call.1} parent=1 // pred_fallthru
      _
    // Predicated region
    $region6: #{tpu_custom_call.1} parent=1 // pred_check
      _
    $region7: #{tpu_custom_call.1} parent=1 // pred_check_branch
      %22 = sbr.rel (0) target = $region9
    $region8: #{tpu_custom_call.1} parent=1 // pred_region
      %24 = vsyncadd [#allocation6], 0
      %s25 = sshll.u32 %s1, 4
      %s26 = int_to_ptr.hbm [resolvable:$true] %s25
      %s27 = sshll.u32 [#allocation5], 4
      %s28 = int_to_ptr.vmem [resolvable:$true] %s27
      %33 = dma.hbm_to_vmem [thread:$0]  %s26, 4480, %s28, [#allocation6], 128, 128, 8
    $region9: #{tpu_custom_call.1} parent=1 // pred_fallthru
      _
    // Predicated region
    $region10: #{tpu_custom_call.1} parent=1 // pred_check
      _
    $region11: #{tpu_custom_call.1} parent=1 // pred_check_branch
      %35 = sbr.rel (0) target = $region13
    $region12: #{tpu_custom_call.1} parent=1 // pred_region
      %37 = dma.done [#allocation3], 128
    $region13: #{tpu_custom_call.1} parent=1 // pred_fallthru
      _
    // Predicated region
    $region14: #{tpu_custom_call.1} parent=1 // pred_check
      _
    $region15: #{tpu_custom_call.1} parent=1 // pred_check_branch
      %39 = sbr.rel (0) target = $region17
    $region16: #{tpu_custom_call.1} parent=1 // pred_region
      %41 = dma.done [#allocation6], 4480
    $region17: #{tpu_custom_call.1} parent=1 // pred_fallthru
      _
    %v42 = vld [vmem:[#allocation2] sm:$0xff]
    %v43 = vld [vmem:[#allocation5] sm:$0xff]
    %v44 = vld [vmem:[#allocation5 + $0x8] sm:$0xff]
    %v45 = vld [vmem:[#allocation5 + $0x10] sm:$0xff]
    %v46 = vld [vmem:[#allocation5 + $0x18] sm:$0xff]
    %v47 = vld [vmem:[#allocation5 + $0x20] sm:$0xff]
    %v48 = vld [vmem:[#allocation5 + $0x28] sm:$0xff]
    %v49 = vld [vmem:[#allocation5 + $0x30] sm:$0xff]
    %v50 = vld [vmem:[#allocation5 + $0x38] sm:$0xff]
    %v51 = vld [vmem:[#allocation5 + $0x40] sm:$0xff]
    %v52 = vld [vmem:[#allocation5 + $0x48] sm:$0xff]
    %v53 = vld [vmem:[#allocation5 + $0x50] sm:$0xff]
    %v54 = vld [vmem:[#allocation5 + $0x58] sm:$0xff]
    %v55 = vld [vmem:[#allocation5 + $0x60] sm:$0xff]
    %v56 = vld [vmem:[#allocation5 + $0x68] sm:$0xff]
    %v57 = vld [vmem:[#allocation5 + $0x70] sm:$0xff]
    %v58 = vld [vmem:[#allocation5 + $0x78] sm:$0xff]
    %v59 = vld [vmem:[#allocation5 + $0x80] sm:$0xff]
    %v60 = vld [vmem:[#allocation5 + $0x88] sm:$0xff]
    %v61 = vld [vmem:[#allocation5 + $0x90] sm:$0xff]
    %v62 = vld [vmem:[#allocation5 + $0x98] sm:$0xff]
    %v63 = vld [vmem:[#allocation5 + $0xa0] sm:$0xff]
    %v64 = vld [vmem:[#allocation5 + $0xa8] sm:$0xff]
    %v65 = vld [vmem:[#allocation5 + $0xb0] sm:$0xff]
    %v66 = vld [vmem:[#allocation5 + $0xb8] sm:$0xff]
    %v67 = vld [vmem:[#allocation5 + $0xc0] sm:$0xff]
    %v68 = vld [vmem:[#allocation5 + $0xc8] sm:$0xff]
    %v69 = vld [vmem:[#allocation5 + $0xd0] sm:$0xff]
    %v70 = vld [vmem:[#allocation5 + $0xd8] sm:$0xff]
    %v71 = vld [vmem:[#allocation5 + $0xe0] sm:$0xff]
    %v72 = vld [vmem:[#allocation5 + $0xe8] sm:$0xff]
    %v73 = vld [vmem:[#allocation5 + $0xf0] sm:$0xff]
    %v74 = vld [vmem:[#allocation5 + $0xf8] sm:$0xff]
    %v75 = vld [vmem:[#allocation5 + $0x100] sm:$0xff]
    %v76 = vld [vmem:[#allocation5 + $0x108] sm:$0xff]
    %v77 = vld [vmem:[#allocation5 + $0x110] sm:$0xff]
    %v78 = vlaneseq
    %v79 = vand.u32 %v78, 127
    %vm80 = vcmp.lt.s32.totalorder %v79, 32
    %v81 = vperm.slane %v77, 0
    %vm82 = vcmask 130048
    %v84 = vsel %vm82, %v42, 0
    %86 = vmatpush.msra.mxu0 0.0
    %87 = vmatpush.msra.mxu0 0.0
    %88 = vmatpush.msra.mxu0 0.0
    %89 = vmatpush.msra.mxu0 0.0
    %90 = vmatpush.msra.mxu0 0.0
    %91 = vmatpush.msra.mxu0 0.0
    %92 = vmatpush.msra.mxu0 0.0
    %93 = vmatpush.msra.mxu0 0.0
    %94 = vmatpush.msra.mxu0 0.0
    %95 = vmatpush.msra.mxu0 0.0
    %96 = vmatpush.msra.mxu0 0.0
    %97 = vmatpush.msra.mxu0 0.0
    %98 = vmatpush.msra.mxu0 0.0
    %99 = vmatpush.msra.mxu0 0.0
    %100 = vmatpush.msra.mxu0 %v44
    %101 = vmatpush.msra.mxu0 %v43
    %102 = vmatmul.f32.gmra.mxu0 %v84
    %v103 = vpop.f32.mrf.mxu0
    %v104 = vadd.f32 %v81, %v103
    %105 = vdwg.mxu0
    %106 = vadd.xlane.f32.xlu0 %v104
    %v107 = vpop.xlane.xlu0 %106
    %v108 = vmul.f32 %v107, 0.03125
    %v109 = vsub.f32 %v104, %v108
    %v110 = vsel %vm80, 1, 0
    %vm111 = vcmp.eq.s32.totalorder %v110, 1
    %v112 = vsel %vm111, %v109, 0.0
    %v113 = vmul.f32 %v112, %v112
    %114 = vadd.xlane.f32.xlu0 %v113
    %v115 = vpop.xlane.xlu0 %114
    %v116 = vmul.f32 %v115, 0.03125
    %v117 = vadd.f32 %v116, 1e-05
    %v118 = vrsqrt.pop %v117
    %v119 = vmul.f32 %v118, %v117
    %v120 = vmul.f32 %v119, %v118
    %v121 = vmul.f32 0.5, %v120
    %v122 = vsub.f32 1.5, %v121
    %v123 = vmul.f32 %v118, %v122
    %vm124 = vweird.f32 %v117
    %vm125 = vweird.f32 %v118
    %vm126 = vmor %vm124, %vm125
    %v127 = vsel %vm126, %v118, %v123
    %v128 = vmul.f32 %v112, %v127
    %v129 = vperm.slane %v77, 1
    %v130 = vmul.f32 %v129, %v128
    %v131 = vperm.slane %v77, 2
    %v132 = vadd.f32 %v130, %v131
    %v133 = vmax.f32 %v132, 0.0
    %v134 = vperm.slane %v77, 3
    %135 = vmatpush.msra.mxu0 %v60
    %136 = vmatpush.msra.mxu0 %v59
    %137 = vmatpush.msra.mxu0 %v58
    %138 = vmatpush.msra.mxu0 %v57
    %139 = vmatpush.msra.mxu0 %v56
    %140 = vmatpush.msra.mxu0 %v55
    %141 = vmatpush.msra.mxu0 %v54
    %142 = vmatpush.msra.mxu0 %v53
    %143 = vmatpush.msra.mxu0 %v52
    %144 = vmatpush.msra.mxu0 %v51
    %145 = vmatpush.msra.mxu0 %v50
    %146 = vmatpush.msra.mxu0 %v49
    %147 = vmatpush.msra.mxu0 %v48
    %148 = vmatpush.msra.mxu0 %v47
    %149 = vmatpush.msra.mxu0 %v46
    %150 = vmatpush.msra.mxu0 %v45
    %151 = vmatmul.f32.gmra.mxu0 %v133
    %v152 = vpop.f32.mrf.mxu0
    %v153 = vadd.f32 %v134, %v152
    %154 = vdwg.mxu0
    %155 = vadd.xlane.f32.xlu0 %v153
    %v156 = vpop.xlane.xlu0 %155
    %v157 = vmul.f32 %v156, 0.03125
    %v158 = vsub.f32 %v153, %v157
    %v159 = vsel %vm111, %v158, 0.0
    %v160 = vmul.f32 %v159, %v159
    %161 = vadd.xlane.f32.xlu0 %v160
    %v162 = vpop.xlane.xlu0 %161
    %v163 = vmul.f32 %v162, 0.03125
    %v164 = vadd.f32 %v163, 1e-05
    %v165 = vrsqrt.pop %v164
    %v166 = vmul.f32 %v165, %v164
    %v167 = vmul.f32 %v166, %v165
    %v168 = vmul.f32 0.5, %v167
    %v169 = vsub.f32 1.5, %v168
    %v170 = vmul.f32 %v165, %v169
    %vm171 = vweird.f32 %v164
    %vm172 = vweird.f32 %v165
    %vm173 = vmor %vm171, %vm172
    %v174 = vsel %vm173, %v165, %v170
    %v175 = vmul.f32 %v159, %v174
    %v176 = vperm.slane %v77, 4
    %v177 = vmul.f32 %v176, %v175
    %v178 = vperm.slane %v77, 5
    %v179 = vadd.f32 %v177, %v178
    %v180 = vmax.f32 %v179, 0.0
    %v181 = vperm.slane %v77, 6
    %182 = vmatpush.msra.mxu0 %v76
    %183 = vmatpush.msra.mxu0 %v75
    %184 = vmatpush.msra.mxu0 %v74
    %185 = vmatpush.msra.mxu0 %v73
    %186 = vmatpush.msra.mxu0 %v72
    %187 = vmatpush.msra.mxu0 %v71
    %188 = vmatpush.msra.mxu0 %v70
    %189 = vmatpush.msra.mxu0 %v69
    %190 = vmatpush.msra.mxu0 %v68
    %191 = vmatpush.msra.mxu0 %v67
    %192 = vmatpush.msra.mxu0 %v66
    %193 = vmatpush.msra.mxu0 %v65
    %194 = vmatpush.msra.mxu0 %v64
    %195 = vmatpush.msra.mxu0 %v63
    %196 = vmatpush.msra.mxu0 %v62
    %197 = vmatpush.msra.mxu0 %v61
    %198 = vmatmul.f32.gmra.mxu0 %v180
    %v199 = vpop.f32.mrf.mxu0
    %v200 = vadd.f32 %v181, %v199
    %201 = vdwg.mxu0
    %202 = vst [vmem:[#allocation7] sm:$0xff] %v200
    // Predicated region
    $region18: #{tpu_custom_call.1} parent=1 // pred_check
      _
    $region19: #{tpu_custom_call.1} parent=1 // pred_check_branch
      %204 = sbr.rel (0) target = $region21
    $region20: #{tpu_custom_call.1} parent=1 // pred_region
      %206 = vsyncadd [#allocation4], 0
      %s208 = sshll.u32 [#allocation7], 4
      %s209 = int_to_ptr.vmem [resolvable:$true] %s208
      %s210 = sshll.u32 %s2, 4
      %s211 = int_to_ptr.hbm [resolvable:$true] %s210
      %213 = dma.vmem_to_hbm [thread:$0]  %s209, 128, %s211, [#allocation4]
    $region21: #{tpu_custom_call.1} parent=1 // pred_fallthru
      _
    // Predicated region
    $region22: #{tpu_custom_call.1} parent=1 // pred_check
      _
    $region23: #{tpu_custom_call.1} parent=1 // pred_check_branch
      %215 = sbr.rel (0) target = $region25
    $region24: #{tpu_custom_call.1} parent=1 // pred_region
      %217 = dma.done [#allocation4], 128
    $region25: #{tpu_custom_call.1} parent=1 // pred_fallthru
      _
    %218 = vsyncpa [#allocation3], 1
    %219 = vsyncpa [#allocation6], 1
    %220 = vsyncpa [#allocation4], 1

</llo_original>
